<compile_context>
chip_gen: v6e
topology: v6e:2x2x1
jax: 0.10.0
libtpu: 0.0.40
codegen_flags: <defaults>
</compile_context>

<pallas_src>
import jax
import jax.numpy as jnp
from jax.experimental import pallas as pl
from jax.experimental.pallas import tpu as pltpu


def lstm_predictor_kernel(x_ref, wih_ref, whh_ref, b_ref, fcw_ref, fcb_ref,
                          out_ref):
    # x_ref  : (T*B, D)   time-major flattened input (row = t*B + b)
    # wih_ref: (D, 4H)    stacked input weights, gate order (i, f, g, o)
    # whh_ref: (H, 4H)    stacked recurrent weights
    # b_ref  : (1, 4H)    combined bias (b_ih + b_hh)
    # fcw_ref: (H, O), fcb_ref: (1, O), out_ref: (B, O)
    H = whh_ref.shape[0]
    B = out_ref.shape[0]
    T = x_ref.shape[0] // B

    # Hoisted, time-invariant input projection: a single lane-dense
    # (T*B, 4H=128) MXU matmul plus a single broadcast bias add.
    gx = (jnp.dot(x_ref[...], wih_ref[...], preferred_element_type=jnp.float32)
          + b_ref[...])                                   # (T*B, 4H)
    # Extract the per-step (B, 4H) slabs up front; these only depend on x, so
    # the extraction sits off the serial h -> h critical path.
    gx_t = [gx[t * B:(t + 1) * B, :] for t in range(T)]

    whh = whh_ref[...]                                    # (H, 4H) = (32, 128)
    h = jnp.zeros((B, H), jnp.float32)
    c = jnp.zeros((B, H), jnp.float32)

    # T is small and static -> fully unrolled serial recurrence.  Per step:
    #   one fused 128-lane h @ W_hh matmul, one sigmoid + one tanh over all
    #   128 lanes, cheap static lane slices to pick out i, f, g, o.
    for t in range(T):
        z = gx_t[t] + jnp.dot(h, whh, preferred_element_type=jnp.float32)  # (B, 4H)
        s = jax.nn.sigmoid(z)
        th = jnp.tanh(z)
        i = s[:, 0 * H:1 * H]
        f = s[:, 1 * H:2 * H]
        g = th[:, 2 * H:3 * H]
        o = s[:, 3 * H:4 * H]
        c = f * c + i * g
        h = o * jnp.tanh(c)

    # Fused output Linear on the last hidden state.
    # (O=4 < 128 lanes -> one masked partial store; negligible, single store.)
    out_ref[...] = (jnp.dot(h, fcw_ref[...], preferred_element_type=jnp.float32)
                    + fcb_ref[...]).astype(out_ref.dtype)


def predictor_forward(x, w_ih, w_hh, b, fc_w, fc_b):
    """x: (B, T, D); w_ih: (D, 4H); w_hh: (H, 4H); b: (1, 4H);
    fc_w: (H, O); fc_b: (1, O)  ->  (B, O)"""
    B, T, D = x.shape
    O = fc_w.shape[1]

    # Only wrapper-side layout work: time-major flatten of x so each step's
    # rows are contiguous.  Gate weights/bias stay stacked (last dim 4H=128),
    # which is exactly the lane-dense layout the MXU / vregs want.
    x_tm = jnp.transpose(x, (1, 0, 2)).reshape(T * B, D)

    vmem = pl.BlockSpec(memory_space=pltpu.MemorySpace.VMEM)
    return pl.pallas_call(
        lstm_predictor_kernel,
        out_shape=jax.ShapeDtypeStruct((B, O), x.dtype),
        in_specs=[vmem] * 6,
        out_specs=vmem,
    )(x_tm, w_ih, w_hh, b, fc_w, fc_b)


def predictor_reference(x, w_ih, w_hh, b, fc_w, fc_b):
    """Pure-JAX reference matching PyTorch nn.LSTM + Linear semantics."""
    B, T, D = x.shape
    H = w_hh.shape[0]
    h = jnp.zeros((B, H), jnp.float32)
    c = jnp.zeros((B, H), jnp.float32)
    for t in range(T):
        gates = x[:, t, :] @ w_ih + h @ w_hh + b
        i = jax.nn.sigmoid(gates[:, 0 * H:1 * H])
        f = jax.nn.sigmoid(gates[:, 1 * H:2 * H])
        g = jnp.tanh(gates[:, 2 * H:3 * H])
        o = jax.nn.sigmoid(gates[:, 3 * H:4 * H])
        c = f * c + i * g
        h = o * jnp.tanh(c)
    return h @ fc_w + fc_b


if __name__ == "__main__":
    # Small shapes consistent with the module's forward.
    B, T, D, H, O = 2, 8, 4, 32, 4

    key = jax.random.PRNGKey(0)
    keys = jax.random.split(key, 8)
    scale = 1.0 / jnp.sqrt(H)  # PyTorch default init range for LSTM/Linear

    x = jax.random.normal(keys[0], (B, T, D), jnp.float32)

    # LSTM parameters (gate order i, f, g, o), stored transposed for x @ W.
    w_ih = jax.random.uniform(keys[1], (D, 4 * H), jnp.float32, -scale, scale)
    w_hh = jax.random.uniform(keys[2], (H, 4 * H), jnp.float32, -scale, scale)
    b_ih = jax.random.uniform(keys[3], (1, 4 * H), jnp.float32, -scale, scale)
    b_hh = jax.random.uniform(keys[4], (1, 4 * H), jnp.float32, -scale, scale)
    b = b_ih + b_hh

    # Output Linear layer.
    fc_w = jax.random.uniform(keys[5], (H, O), jnp.float32, -scale, scale)
    fc_b = jax.random.uniform(keys[6], (1, O), jnp.float32, -scale, scale)

    out = predictor_forward(x, w_ih, w_hh, b, fc_w, fc_b)
    out = jax.block_until_ready(out)

    ref = predictor_reference(x, w_ih, w_hh, b, fc_w, fc_b)
    assert out.shape == (B, O)
    assert jnp.allclose(out, ref, atol=1e-5, rtol=1e-5), (out, ref)

    print("KERNEL_OK")
</pallas_src>

<mosaic_0001>
module attributes {stable_mosaic.version = 11 : i64} {
  func.func @lstm_predictor_kernel(%arg0: memref<16x4xf32, #tpu.memory_space<vmem>>, %arg1: memref<4x128xf32, #tpu.memory_space<vmem>>, %arg2: memref<32x128xf32, #tpu.memory_space<vmem>>, %arg3: memref<1x128xf32, #tpu.memory_space<vmem>>, %arg4: memref<32x4xf32, #tpu.memory_space<vmem>>, %arg5: memref<1x4xf32, #tpu.memory_space<vmem>>, %arg6: memref<2x4xf32, #tpu.memory_space<vmem>>) attributes {dimension_semantics = [], scalar_prefetch = 0 : i64, scratch_operands = 0 : i64, tpu.core_type = #tpu.core_type<tc>} {
    %c0 = arith.constant 0 : index
    %c0_0 = arith.constant 0 : index
    %0 = vector.load %arg0[%c0, %c0_0] : memref<16x4xf32, #tpu.memory_space<vmem>>, vector<16x4xf32>
    %c0_1 = arith.constant 0 : index
    %c0_2 = arith.constant 0 : index
    %1 = vector.load %arg1[%c0_1, %c0_2] : memref<4x128xf32, #tpu.memory_space<vmem>>, vector<4x128xf32>
    %cst = arith.constant dense<0.000000e+00> : vector<16x128xf32>
    %2 = tpu.matmul %0, %1, %cst {dimension_numbers = #tpu.dot_dimension_numbers<[1], [0], [0], [1], [0, 0, 1, 1], [], []>} : vector<16x4xf32>, vector<4x128xf32>, vector<16x128xf32> -> vector<16x128xf32>
    %c0_3 = arith.constant 0 : index
    %c0_4 = arith.constant 0 : index
    %3 = vector.load %arg3[%c0_3, %c0_4] : memref<1x128xf32, #tpu.memory_space<vmem>>, vector<1x128xf32>
    %4 = vector.broadcast %3 : vector<1x128xf32> to vector<16x128xf32>
    %5 = arith.addf %2, %4 : vector<16x128xf32>
    %6 = vector.extract_strided_slice %5 {offsets = [0, 0], sizes = [2, 128], strides = [1, 1]} : vector<16x128xf32> to vector<2x128xf32>
    %7 = vector.extract_strided_slice %5 {offsets = [2, 0], sizes = [2, 128], strides = [1, 1]} : vector<16x128xf32> to vector<2x128xf32>
    %8 = vector.extract_strided_slice %5 {offsets = [4, 0], sizes = [2, 128], strides = [1, 1]} : vector<16x128xf32> to vector<2x128xf32>
    %9 = vector.extract_strided_slice %5 {offsets = [6, 0], sizes = [2, 128], strides = [1, 1]} : vector<16x128xf32> to vector<2x128xf32>
    %10 = vector.extract_strided_slice %5 {offsets = [8, 0], sizes = [2, 128], strides = [1, 1]} : vector<16x128xf32> to vector<2x128xf32>
    %11 = vector.extract_strided_slice %5 {offsets = [10, 0], sizes = [2, 128], strides = [1, 1]} : vector<16x128xf32> to vector<2x128xf32>
    %12 = vector.extract_strided_slice %5 {offsets = [12, 0], sizes = [2, 128], strides = [1, 1]} : vector<16x128xf32> to vector<2x128xf32>
    %13 = vector.extract_strided_slice %5 {offsets = [14, 0], sizes = [2, 128], strides = [1, 1]} : vector<16x128xf32> to vector<2x128xf32>
    %c0_5 = arith.constant 0 : index
    %c0_6 = arith.constant 0 : index
    %14 = vector.load %arg2[%c0_5, %c0_6] : memref<32x128xf32, #tpu.memory_space<vmem>>, vector<32x128xf32>
    %cst_7 = arith.constant 0.000000e+00 : f32
    %15 = vector.broadcast %cst_7 : f32 to vector<2x32xf32>
    %cst_8 = arith.constant 0.000000e+00 : f32
    %16 = vector.broadcast %cst_8 : f32 to vector<2x32xf32>
    %cst_9 = arith.constant dense<0.000000e+00> : vector<2x128xf32>
    %17 = tpu.matmul %15, %14, %cst_9 {dimension_numbers = #tpu.dot_dimension_numbers<[1], [0], [0], [1], [0, 0, 1, 1], [], []>} : vector<2x32xf32>, vector<32x128xf32>, vector<2x128xf32> -> vector<2x128xf32>
    %18 = arith.addf %6, %17 : vector<2x128xf32>
    %19 = arith.negf %18 : vector<2x128xf32>
    %20 = math.exp %19 : vector<2x128xf32>
    %cst_10 = arith.constant 1.000000e+00 : f32
    %21 = vector.broadcast %cst_10 : f32 to vector<2x128xf32>
    %22 = arith.addf %21, %20 : vector<2x128xf32>
    %23 = arith.divf %21, %22 : vector<2x128xf32>
    %24 = math.tanh %18 : vector<2x128xf32>
    %25 = vector.extract_strided_slice %23 {offsets = [0, 0], sizes = [2, 32], strides = [1, 1]} : vector<2x128xf32> to vector<2x32xf32>
    %26 = vector.extract_strided_slice %23 {offsets = [0, 32], sizes = [2, 32], strides = [1, 1]} : vector<2x128xf32> to vector<2x32xf32>
    %27 = vector.extract_strided_slice %24 {offsets = [0, 64], sizes = [2, 32], strides = [1, 1]} : vector<2x128xf32> to vector<2x32xf32>
    %28 = vector.extract_strided_slice %23 {offsets = [0, 96], sizes = [2, 32], strides = [1, 1]} : vector<2x128xf32> to vector<2x32xf32>
    %29 = arith.mulf %26, %16 : vector<2x32xf32>
    %30 = arith.mulf %25, %27 : vector<2x32xf32>
    %31 = arith.addf %29, %30 : vector<2x32xf32>
    %32 = math.tanh %31 : vector<2x32xf32>
    %33 = arith.mulf %28, %32 : vector<2x32xf32>
    %cst_11 = arith.constant dense<0.000000e+00> : vector<2x128xf32>
    %34 = tpu.matmul %33, %14, %cst_11 {dimension_numbers = #tpu.dot_dimension_numbers<[1], [0], [0], [1], [0, 0, 1, 1], [], []>} : vector<2x32xf32>, vector<32x128xf32>, vector<2x128xf32> -> vector<2x128xf32>
    %35 = arith.addf %7, %34 : vector<2x128xf32>
    %36 = arith.negf %35 : vector<2x128xf32>
    %37 = math.exp %36 : vector<2x128xf32>
    %cst_12 = arith.constant 1.000000e+00 : f32
    %38 = vector.broadcast %cst_12 : f32 to vector<2x128xf32>
    %39 = arith.addf %38, %37 : vector<2x128xf32>
    %40 = arith.divf %38, %39 : vector<2x128xf32>
    %41 = math.tanh %35 : vector<2x128xf32>
    %42 = vector.extract_strided_slice %40 {offsets = [0, 0], sizes = [2, 32], strides = [1, 1]} : vector<2x128xf32> to vector<2x32xf32>
    %43 = vector.extract_strided_slice %40 {offsets = [0, 32], sizes = [2, 32], strides = [1, 1]} : vector<2x128xf32> to vector<2x32xf32>
    %44 = vector.extract_strided_slice %41 {offsets = [0, 64], sizes = [2, 32], strides = [1, 1]} : vector<2x128xf32> to vector<2x32xf32>
    %45 = vector.extract_strided_slice %40 {offsets = [0, 96], sizes = [2, 32], strides = [1, 1]} : vector<2x128xf32> to vector<2x32xf32>
    %46 = arith.mulf %43, %31 : vector<2x32xf32>
    %47 = arith.mulf %42, %44 : vector<2x32xf32>
    %48 = arith.addf %46, %47 : vector<2x32xf32>
    %49 = math.tanh %48 : vector<2x32xf32>
    %50 = arith.mulf %45, %49 : vector<2x32xf32>
    %cst_13 = arith.constant dense<0.000000e+00> : vector<2x128xf32>
    %51 = tpu.matmul %50, %14, %cst_13 {dimension_numbers = #tpu.dot_dimension_numbers<[1], [0], [0], [1], [0, 0, 1, 1], [], []>} : vector<2x32xf32>, vector<32x128xf32>, vector<2x128xf32> -> vector<2x128xf32>
    %52 = arith.addf %8, %51 : vector<2x128xf32>
    %53 = arith.negf %52 : vector<2x128xf32>
    %54 = math.exp %53 : vector<2x128xf32>
    %cst_14 = arith.constant 1.000000e+00 : f32
    %55 = vector.broadcast %cst_14 : f32 to vector<2x128xf32>
    %56 = arith.addf %55, %54 : vector<2x128xf32>
    %57 = arith.divf %55, %56 : vector<2x128xf32>
    %58 = math.tanh %52 : vector<2x128xf32>
    %59 = vector.extract_strided_slice %57 {offsets = [0, 0], sizes = [2, 32], strides = [1, 1]} : vector<2x128xf32> to vector<2x32xf32>
    %60 = vector.extract_strided_slice %57 {offsets = [0, 32], sizes = [2, 32], strides = [1, 1]} : vector<2x128xf32> to vector<2x32xf32>
    %61 = vector.extract_strided_slice %58 {offsets = [0, 64], sizes = [2, 32], strides = [1, 1]} : vector<2x128xf32> to vector<2x32xf32>
    %62 = vector.extract_strided_slice %57 {offsets = [0, 96], sizes = [2, 32], strides = [1, 1]} : vector<2x128xf32> to vector<2x32xf32>
    %63 = arith.mulf %60, %48 : vector<2x32xf32>
    %64 = arith.mulf %59, %61 : vector<2x32xf32>
    %65 = arith.addf %63, %64 : vector<2x32xf32>
    %66 = math.tanh %65 : vector<2x32xf32>
    %67 = arith.mulf %62, %66 : vector<2x32xf32>
    %cst_15 = arith.constant dense<0.000000e+00> : vector<2x128xf32>
    %68 = tpu.matmul %67, %14, %cst_15 {dimension_numbers = #tpu.dot_dimension_numbers<[1], [0], [0], [1], [0, 0, 1, 1], [], []>} : vector<2x32xf32>, vector<32x128xf32>, vector<2x128xf32> -> vector<2x128xf32>
    %69 = arith.addf %9, %68 : vector<2x128xf32>
    %70 = arith.negf %69 : vector<2x128xf32>
    %71 = math.exp %70 : vector<2x128xf32>
    %cst_16 = arith.constant 1.000000e+00 : f32
    %72 = vector.broadcast %cst_16 : f32 to vector<2x128xf32>
    %73 = arith.addf %72, %71 : vector<2x128xf32>
    %74 = arith.divf %72, %73 : vector<2x128xf32>
    %75 = math.tanh %69 : vector<2x128xf32>
    %76 = vector.extract_strided_slice %74 {offsets = [0, 0], sizes = [2, 32], strides = [1, 1]} : vector<2x128xf32> to vector<2x32xf32>
    %77 = vector.extract_strided_slice %74 {offsets = [0, 32], sizes = [2, 32], strides = [1, 1]} : vector<2x128xf32> to vector<2x32xf32>
    %78 = vector.extract_strided_slice %75 {offsets = [0, 64], sizes = [2, 32], strides = [1, 1]} : vector<2x128xf32> to vector<2x32xf32>
    %79 = vector.extract_strided_slice %74 {offsets = [0, 96], sizes = [2, 32], strides = [1, 1]} : vector<2x128xf32> to vector<2x32xf32>
    %80 = arith.mulf %77, %65 : vector<2x32xf32>
    %81 = arith.mulf %76, %78 : vector<2x32xf32>
    %82 = arith.addf %80, %81 : vector<2x32xf32>
    %83 = math.tanh %82 : vector<2x32xf32>
    %84 = arith.mulf %79, %83 : vector<2x32xf32>
    %cst_17 = arith.constant dense<0.000000e+00> : vector<2x128xf32>
    %85 = tpu.matmul %84, %14, %cst_17 {dimension_numbers = #tpu.dot_dimension_numbers<[1], [0], [0], [1], [0, 0, 1, 1], [], []>} : vector<2x32xf32>, vector<32x128xf32>, vector<2x128xf32> -> vector<2x128xf32>
    %86 = arith.addf %10, %85 : vector<2x128xf32>
    %87 = arith.negf %86 : vector<2x128xf32>
    %88 = math.exp %87 : vector<2x128xf32>
    %cst_18 = arith.constant 1.000000e+00 : f32
    %89 = vector.broadcast %cst_18 : f32 to vector<2x128xf32>
    %90 = arith.addf %89, %88 : vector<2x128xf32>
    %91 = arith.divf %89, %90 : vector<2x128xf32>
    %92 = math.tanh %86 : vector<2x128xf32>
    %93 = vector.extract_strided_slice %91 {offsets = [0, 0], sizes = [2, 32], strides = [1, 1]} : vector<2x128xf32> to vector<2x32xf32>
    %94 = vector.extract_strided_slice %91 {offsets = [0, 32], sizes = [2, 32], strides = [1, 1]} : vector<2x128xf32> to vector<2x32xf32>
    %95 = vector.extract_strided_slice %92 {offsets = [0, 64], sizes = [2, 32], strides = [1, 1]} : vector<2x128xf32> to vector<2x32xf32>
    %96 = vector.extract_strided_slice %91 {offsets = [0, 96], sizes = [2, 32], strides = [1, 1]} : vector<2x128xf32> to vector<2x32xf32>
    %97 = arith.mulf %94, %82 : vector<2x32xf32>
    %98 = arith.mulf %93, %95 : vector<2x32xf32>
    %99 = arith.addf %97, %98 : vector<2x32xf32>
    %100 = math.tanh %99 : vector<2x32xf32>
    %101 = arith.mulf %96, %100 : vector<2x32xf32>
    %cst_19 = arith.constant dense<0.000000e+00> : vector<2x128xf32>
    %102 = tpu.matmul %101, %14, %cst_19 {dimension_numbers = #tpu.dot_dimension_numbers<[1], [0], [0], [1], [0, 0, 1, 1], [], []>} : vector<2x32xf32>, vector<32x128xf32>, vector<2x128xf32> -> vector<2x128xf32>
    %103 = arith.addf %11, %102 : vector<2x128xf32>
    %104 = arith.negf %103 : vector<2x128xf32>
    %105 = math.exp %104 : vector<2x128xf32>
    %cst_20 = arith.constant 1.000000e+00 : f32
    %106 = vector.broadcast %cst_20 : f32 to vector<2x128xf32>
    %107 = arith.addf %106, %105 : vector<2x128xf32>
    %108 = arith.divf %106, %107 : vector<2x128xf32>
    %109 = math.tanh %103 : vector<2x128xf32>
    %110 = vector.extract_strided_slice %108 {offsets = [0, 0], sizes = [2, 32], strides = [1, 1]} : vector<2x128xf32> to vector<2x32xf32>
    %111 = vector.extract_strided_slice %108 {offsets = [0, 32], sizes = [2, 32], strides = [1, 1]} : vector<2x128xf32> to vector<2x32xf32>
    %112 = vector.extract_strided_slice %109 {offsets = [0, 64], sizes = [2, 32], strides = [1, 1]} : vector<2x128xf32> to vector<2x32xf32>
    %113 = vector.extract_strided_slice %108 {offsets = [0, 96], sizes = [2, 32], strides = [1, 1]} : vector<2x128xf32> to vector<2x32xf32>
    %114 = arith.mulf %111, %99 : vector<2x32xf32>
    %115 = arith.mulf %110, %112 : vector<2x32xf32>
    %116 = arith.addf %114, %115 : vector<2x32xf32>
    %117 = math.tanh %116 : vector<2x32xf32>
    %118 = arith.mulf %113, %117 : vector<2x32xf32>
    %cst_21 = arith.constant dense<0.000000e+00> : vector<2x128xf32>
    %119 = tpu.matmul %118, %14, %cst_21 {dimension_numbers = #tpu.dot_dimension_numbers<[1], [0], [0], [1], [0, 0, 1, 1], [], []>} : vector<2x32xf32>, vector<32x128xf32>, vector<2x128xf32> -> vector<2x128xf32>
    %120 = arith.addf %12, %119 : vector<2x128xf32>
    %121 = arith.negf %120 : vector<2x128xf32>
    %122 = math.exp %121 : vector<2x128xf32>
    %cst_22 = arith.constant 1.000000e+00 : f32
    %123 = vector.broadcast %cst_22 : f32 to vector<2x128xf32>
    %124 = arith.addf %123, %122 : vector<2x128xf32>
    %125 = arith.divf %123, %124 : vector<2x128xf32>
    %126 = math.tanh %120 : vector<2x128xf32>
    %127 = vector.extract_strided_slice %125 {offsets = [0, 0], sizes = [2, 32], strides = [1, 1]} : vector<2x128xf32> to vector<2x32xf32>
    %128 = vector.extract_strided_slice %125 {offsets = [0, 32], sizes = [2, 32], strides = [1, 1]} : vector<2x128xf32> to vector<2x32xf32>
    %129 = vector.extract_strided_slice %126 {offsets = [0, 64], sizes = [2, 32], strides = [1, 1]} : vector<2x128xf32> to vector<2x32xf32>
    %130 = vector.extract_strided_slice %125 {offsets = [0, 96], sizes = [2, 32], strides = [1, 1]} : vector<2x128xf32> to vector<2x32xf32>
    %131 = arith.mulf %128, %116 : vector<2x32xf32>
    %132 = arith.mulf %127, %129 : vector<2x32xf32>
    %133 = arith.addf %131, %132 : vector<2x32xf32>
    %134 = math.tanh %133 : vector<2x32xf32>
    %135 = arith.mulf %130, %134 : vector<2x32xf32>
    %cst_23 = arith.constant dense<0.000000e+00> : vector<2x128xf32>
    %136 = tpu.matmul %135, %14, %cst_23 {dimension_numbers = #tpu.dot_dimension_numbers<[1], [0], [0], [1], [0, 0, 1, 1], [], []>} : vector<2x32xf32>, vector<32x128xf32>, vector<2x128xf32> -> vector<2x128xf32>
    %137 = arith.addf %13, %136 : vector<2x128xf32>
    %138 = arith.negf %137 : vector<2x128xf32>
    %139 = math.exp %138 : vector<2x128xf32>
    %cst_24 = arith.constant 1.000000e+00 : f32
    %140 = vector.broadcast %cst_24 : f32 to vector<2x128xf32>
    %141 = arith.addf %140, %139 : vector<2x128xf32>
    %142 = arith.divf %140, %141 : vector<2x128xf32>
    %143 = math.tanh %137 : vector<2x128xf32>
    %144 = vector.extract_strided_slice %142 {offsets = [0, 0], sizes = [2, 32], strides = [1, 1]} : vector<2x128xf32> to vector<2x32xf32>
    %145 = vector.extract_strided_slice %142 {offsets = [0, 32], sizes = [2, 32], strides = [1, 1]} : vector<2x128xf32> to vector<2x32xf32>
    %146 = vector.extract_strided_slice %143 {offsets = [0, 64], sizes = [2, 32], strides = [1, 1]} : vector<2x128xf32> to vector<2x32xf32>
    %147 = vector.extract_strided_slice %142 {offsets = [0, 96], sizes = [2, 32], strides = [1, 1]} : vector<2x128xf32> to vector<2x32xf32>
    %148 = arith.mulf %145, %133 : vector<2x32xf32>
    %149 = arith.mulf %144, %146 : vector<2x32xf32>
    %150 = arith.addf %148, %149 : vector<2x32xf32>
    %151 = math.tanh %150 : vector<2x32xf32>
    %152 = arith.mulf %147, %151 : vector<2x32xf32>
    %c0_25 = arith.constant 0 : index
    %c0_26 = arith.constant 0 : index
    %153 = vector.load %arg4[%c0_25, %c0_26] : memref<32x4xf32, #tpu.memory_space<vmem>>, vector<32x4xf32>
    %cst_27 = arith.constant dense<0.000000e+00> : vector<2x4xf32>
    %154 = tpu.matmul %152, %153, %cst_27 {dimension_numbers = #tpu.dot_dimension_numbers<[1], [0], [0], [1], [0, 0, 1, 1], [], []>} : vector<2x32xf32>, vector<32x4xf32>, vector<2x4xf32> -> vector<2x4xf32>
    %c0_28 = arith.constant 0 : index
    %c0_29 = arith.constant 0 : index
    %155 = vector.load %arg5[%c0_28, %c0_29] : memref<1x4xf32, #tpu.memory_space<vmem>>, vector<1x4xf32>
    %156 = vector.broadcast %155 : vector<1x4xf32> to vector<2x4xf32>
    %157 = arith.addf %154, %156 : vector<2x4xf32>
    %c0_30 = arith.constant 0 : index
    %c0_31 = arith.constant 0 : index
    %158 = vector.load %arg6[%c0_30, %c0_31] : memref<2x4xf32, #tpu.memory_space<vmem>>, vector<2x4xf32>
    tpu.vector_store %arg6[%c0_30, %c0_31], %157 {strides = array<i32>} : memref<2x4xf32, #tpu.memory_space<vmem>>, vector<2x4xf32>,
    return
  }
}

</mosaic_0001>

<llo_original>
// kernel: tpu_custom_call.1
$region0: #{tpu_custom_call.1}
  #allocation0 [shape = 'u32[]', space=smem, size = 0x4, offset = 0x4, fixed_abs, tag = 'smem constant byte address 0x4 - core index']
  #allocation1 [shape = 'u32[144,128]{1,0:T(1,128)}', space=vmem, size = 0x12000, scoped, tag = 'internal scratch']
  %s0 = inlined_call_operand.vmem [shape: f32[16,4], index: 0, kind: input, shape index: {}]
  %s1 = inlined_call_operand.vmem [shape: f32[4,128], index: 1, kind: input, shape index: {}]
  %s2 = inlined_call_operand.vmem [shape: f32[32,128], index: 2, kind: input, shape index: {}]
  %s3 = inlined_call_operand.vmem [shape: f32[1,128], index: 3, kind: input, shape index: {}]
  %s4 = inlined_call_operand.vmem [shape: f32[32,4], index: 4, kind: input, shape index: {}]
  %s5 = inlined_call_operand.vmem [shape: f32[1,4], index: 5, kind: input, shape index: {}]
  %s6 = inlined_call_operand.hbm [shape: f32[2,4], index: 6, kind: output, shape index: {}]
  %s7 = sld [smem:[#allocation0]]
  $region34: #{tpu_custom_call.1} parent=0
    _
  %s9 = ssub.s32 1, %s7
  %s10 = scalar_select 0, %s9, %s7
  $region1: #{tpu_custom_call.1} parent=0
    #allocation2 [shape = 'u8[1024]{0}', space=vmem, size = 0x400, scoped, tag = 'output window, operand 0, single buffered']
    #allocation3 [shape = 's32[1]{0}', space=sflag, size = 0x4, scoped, tag = 'scoped memory for tpu_custom_call.1']
    %11 = vsyncpa [#allocation3], 0
    // Predicated region
    $region2: #{tpu_custom_call.1} parent=1 // pred_check
      _
    $region3: #{tpu_custom_call.1} parent=1 // pred_check_branch
      %13 = sbr.rel (0) target = $region5
    $region4: #{tpu_custom_call.1} parent=1 // pred_region
      _
    $region5: #{tpu_custom_call.1} parent=1 // pred_fallthru
      _
    // Predicated region
    $region6: #{tpu_custom_call.1} parent=1 // pred_check
      _
    $region7: #{tpu_custom_call.1} parent=1 // pred_check_branch
      %15 = sbr.rel (0) target = $region9
    $region8: #{tpu_custom_call.1} parent=1 // pred_region
      _
    $region9: #{tpu_custom_call.1} parent=1 // pred_fallthru
      _
    // Predicated region
    $region10: #{tpu_custom_call.1} parent=1 // pred_check
      _
    $region11: #{tpu_custom_call.1} parent=1 // pred_check_branch
      %17 = sbr.rel (0) target = $region13
    $region12: #{tpu_custom_call.1} parent=1 // pred_region
      _
    $region13: #{tpu_custom_call.1} parent=1 // pred_fallthru
      _
    // Predicated region
    $region14: #{tpu_custom_call.1} parent=1 // pred_check
      _
    $region15: #{tpu_custom_call.1} parent=1 // pred_check_branch
      %19 = sbr.rel (0) target = $region17
    $region16: #{tpu_custom_call.1} parent=1 // pred_region
      _
    $region17: #{tpu_custom_call.1} parent=1 // pred_fallthru
      _
    // Predicated region
    $region18: #{tpu_custom_call.1} parent=1 // pred_check
      _
    $region19: #{tpu_custom_call.1} parent=1 // pred_check_branch
      %21 = sbr.rel (0) target = $region21
    $region20: #{tpu_custom_call.1} parent=1 // pred_region
      _
    $region21: #{tpu_custom_call.1} parent=1 // pred_fallthru
      _
    // Predicated region
    $region22: #{tpu_custom_call.1} parent=1 // pred_check
      _
    $region23: #{tpu_custom_call.1} parent=1 // pred_check_branch
      %23 = sbr.rel (0) target = $region25
    $region24: #{tpu_custom_call.1} parent=1 // pred_region
      _
    $region25: #{tpu_custom_call.1} parent=1 // pred_fallthru
      _
    %v24 = vld [vmem:[%s0] sm:$0xff]
    %v25 = vld [vmem:[%s0 + $0x8] sm:$0xff]
    %v26 = vld [vmem:[%s1] sm:$0xf]
    %v27 = vld [vmem:[%s3] sm:$0x1]
    %v29 = vlaneseq
    %v30 = vshrl.u32 %v29, 7
    %v31 = vsub.s32 0, %v30
    %v32 = vrot.slane %v27, %v31
    %vm34 = vcmask 31744
    %v36 = vsel %vm34, %v24, 0
    %v39 = vsel %vm34, %v25, 0
    %vm41 = vcmask 1043456
    %v43 = vsel %vm41, %v26, 0
    %45 = vmatprep.subr.mxu0 0.0
    %46 = vmatpush1.msra.mxu0 0.0
    %47 = vmatprep.subr.mxu0 0.0
    %48 = vmatpush1.msra.mxu0 0.0
    %49 = vmatprep.subr.mxu0 0.0
    %50 = vmatpush1.msra.mxu0 0.0
    %51 = vmatprep.subr.mxu0 0.0
    %52 = vmatpush1.msra.mxu0 0.0
    %53 = vmatprep.subr.mxu0 0.0
    %54 = vmatpush1.msra.mxu0 0.0
    %55 = vmatprep.subr.mxu0 0.0
    %56 = vmatpush1.msra.mxu0 0.0
    %57 = vmatprep.subr.mxu0 0.0
    %58 = vmatpush1.msra.mxu0 0.0
    %59 = vmatprep.subr.mxu0 0.0
    %60 = vmatpush1.msra.mxu0 0.0
    %61 = vmatprep.subr.mxu0 0.0
    %62 = vmatpush1.msra.mxu0 0.0
    %63 = vmatprep.subr.mxu0 0.0
    %64 = vmatpush1.msra.mxu0 0.0
    %65 = vmatprep.subr.mxu0 0.0
    %66 = vmatpush1.msra.mxu0 0.0
    %67 = vmatprep.subr.mxu0 0.0
    %68 = vmatpush1.msra.mxu0 0.0
    %69 = vmatprep.subr.mxu0 0.0
    %70 = vmatpush1.msra.mxu0 0.0
    %71 = vmatprep.subr.mxu0 0.0
    %72 = vmatpush1.msra.mxu0 0.0
    %73 = vmatprep.subr.mxu0 0.0
    %74 = vmatpush1.msra.mxu0 0.0
    %75 = vmatprep.subr.mxu0 0.0
    %76 = vmatpush1.msra.mxu0 %v43
    %77 = vmatprep.subr.mxu0 0.0
    %78 = vmatpush2.msra.mxu0 0.0
    %79 = vmatprep.subr.mxu0 0.0
    %80 = vmatpush2.msra.mxu0 0.0
    %81 = vmatprep.subr.mxu0 0.0
    %82 = vmatpush2.msra.mxu0 0.0
    %83 = vmatprep.subr.mxu0 0.0
    %84 = vmatpush2.msra.mxu0 0.0
    %85 = vmatprep.subr.mxu0 0.0
    %86 = vmatpush2.msra.mxu0 0.0
    %87 = vmatprep.subr.mxu0 0.0
    %88 = vmatpush2.msra.mxu0 0.0
    %89 = vmatprep.subr.mxu0 0.0
    %90 = vmatpush2.msra.mxu0 0.0
    %91 = vmatprep.subr.mxu0 0.0
    %92 = vmatpush2.msra.mxu0 0.0
    %93 = vmatprep.subr.mxu0 0.0
    %94 = vmatpush2.msra.mxu0 0.0
    %95 = vmatprep.subr.mxu0 0.0
    %96 = vmatpush2.msra.mxu0 0.0
    %97 = vmatprep.subr.mxu0 0.0
    %98 = vmatpush2.msra.mxu0 0.0
    %99 = vmatprep.subr.mxu0 0.0
    %100 = vmatpush2.msra.mxu0 0.0
    %101 = vmatprep.subr.mxu0 0.0
    %102 = vmatpush2.msra.mxu0 0.0
    %103 = vmatprep.subr.mxu0 0.0
    %104 = vmatpush2.msra.mxu0 0.0
    %105 = vmatprep.subr.mxu0 0.0
    %106 = vmatpush2.msra.mxu0 0.0
    %107 = vmatprep.subr.mxu0 0.0
    %108 = vmatpush2.msra.mxu0 0.0
    %109 = vmatprep.mubr.f32.mxu0 0.0
    %110 = vmatmul.mubr.f32.gmra.mxu0 %v36
    %v111 = vpop.f32.mrf.mxu0
    %v112 = vadd.f32 %v32, %v111
    %v113 = vpop.f32.mrf.mxu0
    %114 = vmatprep.mubr.f32.mxu0 0.0
    %115 = vmatmul.mubr.f32.gmra.mxu0 %v39
    %v116 = vpop.f32.mrf.mxu0
    %v117 = vadd.f32 %v32, %v116
    %v118 = vpop.f32.mrf.mxu0
    %119 = vdwg.mxu0
    %v120 = vld [vmem:[%s2] sm:$0xff]
    %v121 = vld [vmem:[%s2 + $0x8] sm:$0xff]
    %v122 = vld [vmem:[%s2 + $0x10] sm:$0xff]
    %v123 = vld [vmem:[%s2 + $0x18] sm:$0xff]
    %vm124 = vcmask 261120
    %v126 = vsel %vm124, 0.0, 0
    %128 = vmatprep.subr.mxu0 0.0
    %129 = vmatpush1.msra.mxu0 0.0
    %130 = vmatprep.subr.mxu0 0.0
    %131 = vmatpush1.msra.mxu0 0.0
    %132 = vmatprep.subr.mxu0 0.0
    %133 = vmatpush1.msra.mxu0 0.0
    %134 = vmatprep.subr.mxu0 0.0
    %135 = vmatpush1.msra.mxu0 0.0
    %136 = vmatprep.subr.mxu0 0.0
    %137 = vmatpush1.msra.mxu0 0.0
    %138 = vmatprep.subr.mxu0 0.0
    %139 = vmatpush1.msra.mxu0 0.0
    %140 = vmatprep.subr.mxu0 0.0
    %141 = vmatpush1.msra.mxu0 0.0
    %142 = vmatprep.subr.mxu0 0.0
    %143 = vmatpush1.msra.mxu0 0.0
    %144 = vmatprep.subr.mxu0 0.0
    %145 = vmatpush1.msra.mxu0 0.0
    %146 = vmatprep.subr.mxu0 0.0
    %147 = vmatpush1.msra.mxu0 0.0
    %148 = vmatprep.subr.mxu0 0.0
    %149 = vmatpush1.msra.mxu0 0.0
    %150 = vmatprep.subr.mxu0 0.0
    %151 = vmatpush1.msra.mxu0 0.0
    %152 = vmatprep.subr.mxu0 0.0
    %153 = vmatpush1.msra.mxu0 %v123
    %154 = vmatprep.subr.mxu0 0.0
    %155 = vmatpush1.msra.mxu0 %v122
    %156 = vmatprep.subr.mxu0 0.0
    %157 = vmatpush1.msra.mxu0 %v121
    %158 = vmatprep.subr.mxu0 0.0
    %159 = vmatpush1.msra.mxu0 %v120
    %160 = vmatprep.subr.mxu0 0.0
    %161 = vmatpush2.msra.mxu0 0.0
    %162 = vmatprep.subr.mxu0 0.0
    %163 = vmatpush2.msra.mxu0 0.0
    %164 = vmatprep.subr.mxu0 0.0
    %165 = vmatpush2.msra.mxu0 0.0
    %166 = vmatprep.subr.mxu0 0.0
    %167 = vmatpush2.msra.mxu0 0.0
    %168 = vmatprep.subr.mxu0 0.0
    %169 = vmatpush2.msra.mxu0 0.0
    %170 = vmatprep.subr.mxu0 0.0
    %171 = vmatpush2.msra.mxu0 0.0
    %172 = vmatprep.subr.mxu0 0.0
    %173 = vmatpush2.msra.mxu0 0.0
    %174 = vmatprep.subr.mxu0 0.0
    %175 = vmatpush2.msra.mxu0 0.0
    %176 = vmatprep.subr.mxu0 0.0
    %177 = vmatpush2.msra.mxu0 0.0
    %178 = vmatprep.subr.mxu0 0.0
    %179 = vmatpush2.msra.mxu0 0.0
    %180 = vmatprep.subr.mxu0 0.0
    %181 = vmatpush2.msra.mxu0 0.0
    %182 = vmatprep.subr.mxu0 0.0
    %183 = vmatpush2.msra.mxu0 0.0
    %184 = vmatprep.subr.mxu0 0.0
    %185 = vmatpush2.msra.mxu0 0.0
    %186 = vmatprep.subr.mxu0 0.0
    %187 = vmatpush2.msra.mxu0 0.0
    %188 = vmatprep.subr.mxu0 0.0
    %189 = vmatpush2.msra.mxu0 0.0
    %190 = vmatprep.subr.mxu0 0.0
    %191 = vmatpush2.msra.mxu0 0.0
    %192 = vmatprep.mubr.f32.mxu0 0.0
    %193 = vmatmul.mubr.f32.gmra.mxu0 %v126
    %v194 = vpop.f32.mrf.mxu0
    %v195 = vadd.f32 0.0, %v194
    %v196 = vpop.f32.mrf.mxu0
    %197 = vdwg.mxu0
    %v198 = vadd.f32 %v112, %v195
    %v199 = vxor.u32 %v198, 2147483648
    %v200 = vmul.f32 %v199, 1.442695
    %v201 = vpow.pop %v200
    %v202 = vadd.f32 %v201, 1.0
    %v203 = vrcp.pop %v202
    %v204 = vmul.f32 1.0, %v203
    %v205 = vtanh.pop %v198
    %v206 = vmul.f32 %v204, 0.0
    %208 = vrot.lane.b32.xlu0 %v205, 64
    %v209 = vpop.permute.xlu0 %208
    %v211 = vmul.f32 %v204, %v209
    %213 = vrot.lane.b32.xlu0 %v211, 32
    %v214 = vpop.permute.xlu0 %213
    %v216 = vadd.f32 %v206, %v214
    %v217 = vtanh.pop %v216
    %219 = vrot.lane.b32.xlu0 %v217, 64
    %v220 = vpop.permute.xlu0 %219
    %v222 = vmul.f32 %v204, %v220
    %224 = vrot.lane.b32.xlu0 %v222, 32
    %v225 = vpop.permute.xlu0 %224
    %v226 = vsel %vm124, %v225, 0
    %228 = vmatprep.subr.mxu0 0.0
    %229 = vmatpush1.msra.mxu0 0.0
    %230 = vmatprep.subr.mxu0 0.0
    %231 = vmatpush1.msra.mxu0 0.0
    %232 = vmatprep.subr.mxu0 0.0
    %233 = vmatpush1.msra.mxu0 0.0
    %234 = vmatprep.subr.mxu0 0.0
    %235 = vmatpush1.msra.mxu0 0.0
    %236 = vmatprep.subr.mxu0 0.0
    %237 = vmatpush1.msra.mxu0 0.0
    %238 = vmatprep.subr.mxu0 0.0
    %239 = vmatpush1.msra.mxu0 0.0
    %240 = vmatprep.subr.mxu0 0.0
    %241 = vmatpush1.msra.mxu0 0.0
    %242 = vmatprep.subr.mxu0 0.0
    %243 = vmatpush1.msra.mxu0 0.0
    %244 = vmatprep.subr.mxu0 0.0
    %245 = vmatpush1.msra.mxu0 0.0
    %246 = vmatprep.subr.mxu0 0.0
    %247 = vmatpush1.msra.mxu0 0.0
    %248 = vmatprep.subr.mxu0 0.0
    %249 = vmatpush1.msra.mxu0 0.0
    %250 = vmatprep.subr.mxu0 0.0
    %251 = vmatpush1.msra.mxu0 0.0
    %252 = vmatprep.subr.mxu0 0.0
    %253 = vmatpush1.msra.mxu0 %v123
    %254 = vmatprep.subr.mxu0 0.0
    %255 = vmatpush1.msra.mxu0 %v122
    %256 = vmatprep.subr.mxu0 0.0
    %257 = vmatpush1.msra.mxu0 %v121
    %258 = vmatprep.subr.mxu0 0.0
    %259 = vmatpush1.msra.mxu0 %v120
    %260 = vmatprep.subr.mxu0 0.0
    %261 = vmatpush2.msra.mxu0 0.0
    %262 = vmatprep.subr.mxu0 0.0
    %263 = vmatpush2.msra.mxu0 0.0
    %264 = vmatprep.subr.mxu0 0.0
    %265 = vmatpush2.msra.mxu0 0.0
    %266 = vmatprep.subr.mxu0 0.0
    %267 = vmatpush2.msra.mxu0 0.0
    %268 = vmatprep.subr.mxu0 0.0
    %269 = vmatpush2.msra.mxu0 0.0
    %270 = vmatprep.subr.mxu0 0.0
    %271 = vmatpush2.msra.mxu0 0.0
    %272 = vmatprep.subr.mxu0 0.0
    %273 = vmatpush2.msra.mxu0 0.0
    %274 = vmatprep.subr.mxu0 0.0
    %275 = vmatpush2.msra.mxu0 0.0
    %276 = vmatprep.subr.mxu0 0.0
    %277 = vmatpush2.msra.mxu0 0.0
    %278 = vmatprep.subr.mxu0 0.0
    %279 = vmatpush2.msra.mxu0 0.0
    %280 = vmatprep.subr.mxu0 0.0
    %281 = vmatpush2.msra.mxu0 0.0
    %282 = vmatprep.subr.mxu0 0.0
    %283 = vmatpush2.msra.mxu0 0.0
    %284 = vmatprep.subr.mxu0 0.0
    %285 = vmatpush2.msra.mxu0 0.0
    %286 = vmatprep.subr.mxu0 0.0
    %287 = vmatpush2.msra.mxu0 0.0
    %288 = vmatprep.subr.mxu0 0.0
    %289 = vmatpush2.msra.mxu0 0.0
    %290 = vmatprep.subr.mxu0 0.0
    %291 = vmatpush2.msra.mxu0 0.0
    %292 = vmatprep.mubr.f32.mxu0 0.0
    %293 = vmatmul.mubr.f32.gmra.mxu0 %v226
    %v294 = vpop.f32.mrf.mxu0
    %v295 = vadd.f32 0.0, %v294
    %v296 = vpop.f32.mrf.mxu0
    %297 = vdwg.mxu0
    %v299 = vrot.slane %v295, 6
    %v301 = vadd.f32 %v112, %v299
    %v302 = vxor.u32 %v301, 2147483648
    %v303 = vmul.f32 %v302, 1.442695
    %v304 = vpow.pop %v303
    %v305 = vadd.f32 %v304, 1.0
    %v306 = vrcp.pop %v305
    %v307 = vmul.f32 1.0, %v306
    %v308 = vtanh.pop %v301
    %v310 = vrot.slane %v216, 6
    %v312 = vmul.f32 %v307, %v310
    %314 = vrot.lane.b32.xlu0 %v308, 64
    %v315 = vpop.permute.xlu0 %314
    %v317 = vmul.f32 %v307, %v315
    %319 = vrot.lane.b32.xlu0 %v317, 32
    %v320 = vpop.permute.xlu0 %319
    %v322 = vadd.f32 %v312, %v320
    %v323 = vtanh.pop %v322
    %325 = vrot.lane.b32.xlu0 %v323, 64
    %v326 = vpop.permute.xlu0 %325
    %v328 = vmul.f32 %v307, %v326
    %v330 = vrot.slane %v328, 2
    %331 = vrot.lane.b32.xlu0 %v330, 32
    %v332 = vpop.permute.xlu0 %331
    %v333 = vsel %vm124, %v332, 0
    %335 = vmatprep.subr.mxu0 0.0
    %336 = vmatpush1.msra.mxu0 0.0
    %337 = vmatprep.subr.mxu0 0.0
    %338 = vmatpush1.msra.mxu0 0.0
    %339 = vmatprep.subr.mxu0 0.0
    %340 = vmatpush1.msra.mxu0 0.0
    %341 = vmatprep.subr.mxu0 0.0
    %342 = vmatpush1.msra.mxu0 0.0
    %343 = vmatprep.subr.mxu0 0.0
    %344 = vmatpush1.msra.mxu0 0.0
    %345 = vmatprep.subr.mxu0 0.0
    %346 = vmatpush1.msra.mxu0 0.0
    %347 = vmatprep.subr.mxu0 0.0
    %348 = vmatpush1.msra.mxu0 0.0
    %349 = vmatprep.subr.mxu0 0.0
    %350 = vmatpush1.msra.mxu0 0.0
    %351 = vmatprep.subr.mxu0 0.0
    %352 = vmatpush1.msra.mxu0 0.0
    %353 = vmatprep.subr.mxu0 0.0
    %354 = vmatpush1.msra.mxu0 0.0
    %355 = vmatprep.subr.mxu0 0.0
    %356 = vmatpush1.msra.mxu0 0.0
    %357 = vmatprep.subr.mxu0 0.0
    %358 = vmatpush1.msra.mxu0 0.0
    %359 = vmatprep.subr.mxu0 0.0
    %360 = vmatpush1.msra.mxu0 %v123
    %361 = vmatprep.subr.mxu0 0.0
    %362 = vmatpush1.msra.mxu0 %v122
    %363 = vmatprep.subr.mxu0 0.0
    %364 = vmatpush1.msra.mxu0 %v121
    %365 = vmatprep.subr.mxu0 0.0
    %366 = vmatpush1.msra.mxu0 %v120
    %367 = vmatprep.subr.mxu0 0.0
    %368 = vmatpush2.msra.mxu0 0.0
    %369 = vmatprep.subr.mxu0 0.0
    %370 = vmatpush2.msra.mxu0 0.0
    %371 = vmatprep.subr.mxu0 0.0
    %372 = vmatpush2.msra.mxu0 0.0
    %373 = vmatprep.subr.mxu0 0.0
    %374 = vmatpush2.msra.mxu0 0.0
    %375 = vmatprep.subr.mxu0 0.0
    %376 = vmatpush2.msra.mxu0 0.0
    %377 = vmatprep.subr.mxu0 0.0
    %378 = vmatpush2.msra.mxu0 0.0
    %379 = vmatprep.subr.mxu0 0.0
    %380 = vmatpush2.msra.mxu0 0.0
    %381 = vmatprep.subr.mxu0 0.0
    %382 = vmatpush2.msra.mxu0 0.0
    %383 = vmatprep.subr.mxu0 0.0
    %384 = vmatpush2.msra.mxu0 0.0
    %385 = vmatprep.subr.mxu0 0.0
    %386 = vmatpush2.msra.mxu0 0.0
    %387 = vmatprep.subr.mxu0 0.0
    %388 = vmatpush2.msra.mxu0 0.0
    %389 = vmatprep.subr.mxu0 0.0
    %390 = vmatpush2.msra.mxu0 0.0
    %391 = vmatprep.subr.mxu0 0.0
    %392 = vmatpush2.msra.mxu0 0.0
    %393 = vmatprep.subr.mxu0 0.0
    %394 = vmatpush2.msra.mxu0 0.0
    %395 = vmatprep.subr.mxu0 0.0
    %396 = vmatpush2.msra.mxu0 0.0
    %397 = vmatprep.subr.mxu0 0.0
    %398 = vmatpush2.msra.mxu0 0.0
    %399 = vmatprep.mubr.f32.mxu0 0.0
    %400 = vmatmul.mubr.f32.gmra.mxu0 %v333
    %v401 = vpop.f32.mrf.mxu0
    %v402 = vadd.f32 0.0, %v401
    %v403 = vpop.f32.mrf.mxu0
    %404 = vdwg.mxu0
    %v406 = vrot.slane %v402, 4
    %v408 = vadd.f32 %v112, %v406
    %v409 = vxor.u32 %v408, 2147483648
    %v410 = vmul.f32 %v409, 1.442695
    %v411 = vpow.pop %v410
    %v412 = vadd.f32 %v411, 1.0
    %v413 = vrcp.pop %v412
    %v414 = vmul.f32 1.0, %v413
    %v415 = vtanh.pop %v408
    %v417 = vrot.slane %v322, 6
    %v419 = vmul.f32 %v414, %v417
    %421 = vrot.lane.b32.xlu0 %v415, 64
    %v422 = vpop.permute.xlu0 %421
    %v424 = vmul.f32 %v414, %v422
    %426 = vrot.lane.b32.xlu0 %v424, 32
    %v427 = vpop.permute.xlu0 %426
    %v429 = vadd.f32 %v419, %v427
    %v430 = vtanh.pop %v429
    %432 = vrot.lane.b32.xlu0 %v430, 64
    %v433 = vpop.permute.xlu0 %432
    %v435 = vmul.f32 %v414, %v433
    %v437 = vrot.slane %v435, 4
    %438 = vrot.lane.b32.xlu0 %v437, 32
    %v439 = vpop.permute.xlu0 %438
    %v440 = vsel %vm124, %v439, 0
    %442 = vmatprep.subr.mxu0 0.0
    %443 = vmatpush1.msra.mxu0 0.0
    %444 = vmatprep.subr.mxu0 0.0
    %445 = vmatpush1.msra.mxu0 0.0
    %446 = vmatprep.subr.mxu0 0.0
    %447 = vmatpush1.msra.mxu0 0.0
    %448 = vmatprep.subr.mxu0 0.0
    %449 = vmatpush1.msra.mxu0 0.0
    %450 = vmatprep.subr.mxu0 0.0
    %451 = vmatpush1.msra.mxu0 0.0
    %452 = vmatprep.subr.mxu0 0.0
    %453 = vmatpush1.msra.mxu0 0.0
    %454 = vmatprep.subr.mxu0 0.0
    %455 = vmatpush1.msra.mxu0 0.0
    %456 = vmatprep.subr.mxu0 0.0
    %457 = vmatpush1.msra.mxu0 0.0
    %458 = vmatprep.subr.mxu0 0.0
    %459 = vmatpush1.msra.mxu0 0.0
    %460 = vmatprep.subr.mxu0 0.0
    %461 = vmatpush1.msra.mxu0 0.0
    %462 = vmatprep.subr.mxu0 0.0
    %463 = vmatpush1.msra.mxu0 0.0
    %464 = vmatprep.subr.mxu0 0.0
    %465 = vmatpush1.msra.mxu0 0.0
    %466 = vmatprep.subr.mxu0 0.0
    %467 = vmatpush1.msra.mxu0 %v123
    %468 = vmatprep.subr.mxu0 0.0
    %469 = vmatpush1.msra.mxu0 %v122
    %470 = vmatprep.subr.mxu0 0.0
    %471 = vmatpush1.msra.mxu0 %v121
    %472 = vmatprep.subr.mxu0 0.0
    %473 = vmatpush1.msra.mxu0 %v120
    %474 = vmatprep.subr.mxu0 0.0
    %475 = vmatpush2.msra.mxu0 0.0
    %476 = vmatprep.subr.mxu0 0.0
    %477 = vmatpush2.msra.mxu0 0.0
    %478 = vmatprep.subr.mxu0 0.0
    %479 = vmatpush2.msra.mxu0 0.0
    %480 = vmatprep.subr.mxu0 0.0
    %481 = vmatpush2.msra.mxu0 0.0
    %482 = vmatprep.subr.mxu0 0.0
    %483 = vmatpush2.msra.mxu0 0.0
    %484 = vmatprep.subr.mxu0 0.0
    %485 = vmatpush2.msra.mxu0 0.0
    %486 = vmatprep.subr.mxu0 0.0
    %487 = vmatpush2.msra.mxu0 0.0
    %488 = vmatprep.subr.mxu0 0.0
    %489 = vmatpush2.msra.mxu0 0.0
    %490 = vmatprep.subr.mxu0 0.0
    %491 = vmatpush2.msra.mxu0 0.0
    %492 = vmatprep.subr.mxu0 0.0
    %493 = vmatpush2.msra.mxu0 0.0
    %494 = vmatprep.subr.mxu0 0.0
    %495 = vmatpush2.msra.mxu0 0.0
    %496 = vmatprep.subr.mxu0 0.0
    %497 = vmatpush2.msra.mxu0 0.0
    %498 = vmatprep.subr.mxu0 0.0
    %499 = vmatpush2.msra.mxu0 0.0
    %500 = vmatprep.subr.mxu0 0.0
    %501 = vmatpush2.msra.mxu0 0.0
    %502 = vmatprep.subr.mxu0 0.0
    %503 = vmatpush2.msra.mxu0 0.0
    %504 = vmatprep.subr.mxu0 0.0
    %505 = vmatpush2.msra.mxu0 0.0
    %506 = vmatprep.mubr.f32.mxu0 0.0
    %507 = vmatmul.mubr.f32.gmra.mxu0 %v440
    %v508 = vpop.f32.mrf.mxu0
    %v509 = vadd.f32 0.0, %v508
    %v510 = vpop.f32.mrf.mxu0
    %511 = vdwg.mxu0
    %v513 = vrot.slane %v509, 2
    %v515 = vadd.f32 %v112, %v513
    %v516 = vxor.u32 %v515, 2147483648
    %v517 = vmul.f32 %v516, 1.442695
    %v518 = vpow.pop %v517
    %v519 = vadd.f32 %v518, 1.0
    %v520 = vrcp.pop %v519
    %v521 = vmul.f32 1.0, %v520
    %v522 = vtanh.pop %v515
    %v524 = vrot.slane %v429, 6
    %v526 = vmul.f32 %v521, %v524
    %528 = vrot.lane.b32.xlu0 %v522, 64
    %v529 = vpop.permute.xlu0 %528
    %v531 = vmul.f32 %v521, %v529
    %533 = vrot.lane.b32.xlu0 %v531, 32
    %v534 = vpop.permute.xlu0 %533
    %v536 = vadd.f32 %v526, %v534
    %v537 = vtanh.pop %v536
    %539 = vrot.lane.b32.xlu0 %v537, 64
    %v540 = vpop.permute.xlu0 %539
    %v542 = vmul.f32 %v521, %v540
    %v544 = vrot.slane %v542, 6
    %545 = vrot.lane.b32.xlu0 %v544, 32
    %v546 = vpop.permute.xlu0 %545
    %v547 = vsel %vm124, %v546, 0
    %549 = vmatprep.subr.mxu0 0.0
    %550 = vmatpush1.msra.mxu0 0.0
    %551 = vmatprep.subr.mxu0 0.0
    %552 = vmatpush1.msra.mxu0 0.0
    %553 = vmatprep.subr.mxu0 0.0
    %554 = vmatpush1.msra.mxu0 0.0
    %555 = vmatprep.subr.mxu0 0.0
    %556 = vmatpush1.msra.mxu0 0.0
    %557 = vmatprep.subr.mxu0 0.0
    %558 = vmatpush1.msra.mxu0 0.0
    %559 = vmatprep.subr.mxu0 0.0
    %560 = vmatpush1.msra.mxu0 0.0
    %561 = vmatprep.subr.mxu0 0.0
    %562 = vmatpush1.msra.mxu0 0.0
    %563 = vmatprep.subr.mxu0 0.0
    %564 = vmatpush1.msra.mxu0 0.0
    %565 = vmatprep.subr.mxu0 0.0
    %566 = vmatpush1.msra.mxu0 0.0
    %567 = vmatprep.subr.mxu0 0.0
    %568 = vmatpush1.msra.mxu0 0.0
    %569 = vmatprep.subr.mxu0 0.0
    %570 = vmatpush1.msra.mxu0 0.0
    %571 = vmatprep.subr.mxu0 0.0
    %572 = vmatpush1.msra.mxu0 0.0
    %573 = vmatprep.subr.mxu0 0.0
    %574 = vmatpush1.msra.mxu0 %v123
    %575 = vmatprep.subr.mxu0 0.0
    %576 = vmatpush1.msra.mxu0 %v122
    %577 = vmatprep.subr.mxu0 0.0
    %578 = vmatpush1.msra.mxu0 %v121
    %579 = vmatprep.subr.mxu0 0.0
    %580 = vmatpush1.msra.mxu0 %v120
    %581 = vmatprep.subr.mxu0 0.0
    %582 = vmatpush2.msra.mxu0 0.0
    %583 = vmatprep.subr.mxu0 0.0
    %584 = vmatpush2.msra.mxu0 0.0
    %585 = vmatprep.subr.mxu0 0.0
    %586 = vmatpush2.msra.mxu0 0.0
    %587 = vmatprep.subr.mxu0 0.0
    %588 = vmatpush2.msra.mxu0 0.0
    %589 = vmatprep.subr.mxu0 0.0
    %590 = vmatpush2.msra.mxu0 0.0
    %591 = vmatprep.subr.mxu0 0.0
    %592 = vmatpush2.msra.mxu0 0.0
    %593 = vmatprep.subr.mxu0 0.0
    %594 = vmatpush2.msra.mxu0 0.0
    %595 = vmatprep.subr.mxu0 0.0
    %596 = vmatpush2.msra.mxu0 0.0
    %597 = vmatprep.subr.mxu0 0.0
    %598 = vmatpush2.msra.mxu0 0.0
    %599 = vmatprep.subr.mxu0 0.0
    %600 = vmatpush2.msra.mxu0 0.0
    %601 = vmatprep.subr.mxu0 0.0
    %602 = vmatpush2.msra.mxu0 0.0
    %603 = vmatprep.subr.mxu0 0.0
    %604 = vmatpush2.msra.mxu0 0.0
    %605 = vmatprep.subr.mxu0 0.0
    %606 = vmatpush2.msra.mxu0 0.0
    %607 = vmatprep.subr.mxu0 0.0
    %608 = vmatpush2.msra.mxu0 0.0
    %609 = vmatprep.subr.mxu0 0.0
    %610 = vmatpush2.msra.mxu0 0.0
    %611 = vmatprep.subr.mxu0 0.0
    %612 = vmatpush2.msra.mxu0 0.0
    %613 = vmatprep.mubr.f32.mxu0 0.0
    %614 = vmatmul.mubr.f32.gmra.mxu0 %v547
    %v615 = vpop.f32.mrf.mxu0
    %v616 = vadd.f32 0.0, %v615
    %v617 = vpop.f32.mrf.mxu0
    %618 = vdwg.mxu0
    %v619 = vadd.f32 %v117, %v616
    %v620 = vxor.u32 %v619, 2147483648
    %v621 = vmul.f32 %v620, 1.442695
    %v622 = vpow.pop %v621
    %v623 = vadd.f32 %v622, 1.0
    %v624 = vrcp.pop %v623
    %v625 = vmul.f32 1.0, %v624
    %v626 = vtanh.pop %v619
    %v628 = vrot.slane %v536, 6
    %v630 = vmul.f32 %v625, %v628
    %632 = vrot.lane.b32.xlu0 %v626, 64
    %v633 = vpop.permute.xlu0 %632
    %v635 = vmul.f32 %v625, %v633
    %637 = vrot.lane.b32.xlu0 %v635, 32
    %v638 = vpop.permute.xlu0 %637
    %v640 = vadd.f32 %v630, %v638
    %v641 = vtanh.pop %v640
    %643 = vrot.lane.b32.xlu0 %v641, 64
    %v644 = vpop.permute.xlu0 %643
    %v646 = vmul.f32 %v625, %v644
    %648 = vrot.lane.b32.xlu0 %v646, 32
    %v649 = vpop.permute.xlu0 %648
    %v650 = vsel %vm124, %v649, 0
    %652 = vmatprep.subr.mxu0 0.0
    %653 = vmatpush1.msra.mxu0 0.0
    %654 = vmatprep.subr.mxu0 0.0
    %655 = vmatpush1.msra.mxu0 0.0
    %656 = vmatprep.subr.mxu0 0.0
    %657 = vmatpush1.msra.mxu0 0.0
    %658 = vmatprep.subr.mxu0 0.0
    %659 = vmatpush1.msra.mxu0 0.0
    %660 = vmatprep.subr.mxu0 0.0
    %661 = vmatpush1.msra.mxu0 0.0
    %662 = vmatprep.subr.mxu0 0.0
    %663 = vmatpush1.msra.mxu0 0.0
    %664 = vmatprep.subr.mxu0 0.0
    %665 = vmatpush1.msra.mxu0 0.0
    %666 = vmatprep.subr.mxu0 0.0
    %667 = vmatpush1.msra.mxu0 0.0
    %668 = vmatprep.subr.mxu0 0.0
    %669 = vmatpush1.msra.mxu0 0.0
    %670 = vmatprep.subr.mxu0 0.0
    %671 = vmatpush1.msra.mxu0 0.0
    %672 = vmatprep.subr.mxu0 0.0
    %673 = vmatpush1.msra.mxu0 0.0
    %674 = vmatprep.subr.mxu0 0.0
    %675 = vmatpush1.msra.mxu0 0.0
    %676 = vmatprep.subr.mxu0 0.0
    %677 = vmatpush1.msra.mxu0 %v123
    %678 = vmatprep.subr.mxu0 0.0
    %679 = vmatpush1.msra.mxu0 %v122
    %680 = vmatprep.subr.mxu0 0.0
    %681 = vmatpush1.msra.mxu0 %v121
    %682 = vmatprep.subr.mxu0 0.0
    %683 = vmatpush1.msra.mxu0 %v120
    %684 = vmatprep.subr.mxu0 0.0
    %685 = vmatpush2.msra.mxu0 0.0
    %686 = vmatprep.subr.mxu0 0.0
    %687 = vmatpush2.msra.mxu0 0.0
    %688 = vmatprep.subr.mxu0 0.0
    %689 = vmatpush2.msra.mxu0 0.0
    %690 = vmatprep.subr.mxu0 0.0
    %691 = vmatpush2.msra.mxu0 0.0
    %692 = vmatprep.subr.mxu0 0.0
    %693 = vmatpush2.msra.mxu0 0.0
    %694 = vmatprep.subr.mxu0 0.0
    %695 = vmatpush2.msra.mxu0 0.0
    %696 = vmatprep.subr.mxu0 0.0
    %697 = vmatpush2.msra.mxu0 0.0
    %698 = vmatprep.subr.mxu0 0.0
    %699 = vmatpush2.msra.mxu0 0.0
    %700 = vmatprep.subr.mxu0 0.0
    %701 = vmatpush2.msra.mxu0 0.0
    %702 = vmatprep.subr.mxu0 0.0
    %703 = vmatpush2.msra.mxu0 0.0
    %704 = vmatprep.subr.mxu0 0.0
    %705 = vmatpush2.msra.mxu0 0.0
    %706 = vmatprep.subr.mxu0 0.0
    %707 = vmatpush2.msra.mxu0 0.0
    %708 = vmatprep.subr.mxu0 0.0
    %709 = vmatpush2.msra.mxu0 0.0
    %710 = vmatprep.subr.mxu0 0.0
    %711 = vmatpush2.msra.mxu0 0.0
    %712 = vmatprep.subr.mxu0 0.0
    %713 = vmatpush2.msra.mxu0 0.0
    %714 = vmatprep.subr.mxu0 0.0
    %715 = vmatpush2.msra.mxu0 0.0
    %716 = vmatprep.mubr.f32.mxu0 0.0
    %717 = vmatmul.mubr.f32.gmra.mxu0 %v650
    %v718 = vpop.f32.mrf.mxu0
    %v719 = vadd.f32 0.0, %v718
    %v720 = vpop.f32.mrf.mxu0
    %721 = vdwg.mxu0
    %v723 = vrot.slane %v719, 6
    %v725 = vadd.f32 %v117, %v723
    %v726 = vxor.u32 %v725, 2147483648
    %v727 = vmul.f32 %v726, 1.442695
    %v728 = vpow.pop %v727
    %v729 = vadd.f32 %v728, 1.0
    %v730 = vrcp.pop %v729
    %v731 = vmul.f32 1.0, %v730
    %v732 = vtanh.pop %v725
    %v734 = vrot.slane %v640, 6
    %v736 = vmul.f32 %v731, %v734
    %738 = vrot.lane.b32.xlu0 %v732, 64
    %v739 = vpop.permute.xlu0 %738
    %v741 = vmul.f32 %v731, %v739
    %743 = vrot.lane.b32.xlu0 %v741, 32
    %v744 = vpop.permute.xlu0 %743
    %v746 = vadd.f32 %v736, %v744
    %v747 = vtanh.pop %v746
    %749 = vrot.lane.b32.xlu0 %v747, 64
    %v750 = vpop.permute.xlu0 %749
    %v752 = vmul.f32 %v731, %v750
    %v754 = vrot.slane %v752, 2
    %755 = vrot.lane.b32.xlu0 %v754, 32
    %v756 = vpop.permute.xlu0 %755
    %v757 = vsel %vm124, %v756, 0
    %759 = vmatprep.subr.mxu0 0.0
    %760 = vmatpush1.msra.mxu0 0.0
    %761 = vmatprep.subr.mxu0 0.0
    %762 = vmatpush1.msra.mxu0 0.0
    %763 = vmatprep.subr.mxu0 0.0
    %764 = vmatpush1.msra.mxu0 0.0
    %765 = vmatprep.subr.mxu0 0.0
    %766 = vmatpush1.msra.mxu0 0.0
    %767 = vmatprep.subr.mxu0 0.0
    %768 = vmatpush1.msra.mxu0 0.0
    %769 = vmatprep.subr.mxu0 0.0
    %770 = vmatpush1.msra.mxu0 0.0
    %771 = vmatprep.subr.mxu0 0.0
    %772 = vmatpush1.msra.mxu0 0.0
    %773 = vmatprep.subr.mxu0 0.0
    %774 = vmatpush1.msra.mxu0 0.0
    %775 = vmatprep.subr.mxu0 0.0
    %776 = vmatpush1.msra.mxu0 0.0
    %777 = vmatprep.subr.mxu0 0.0
    %778 = vmatpush1.msra.mxu0 0.0
    %779 = vmatprep.subr.mxu0 0.0
    %780 = vmatpush1.msra.mxu0 0.0
    %781 = vmatprep.subr.mxu0 0.0
    %782 = vmatpush1.msra.mxu0 0.0
    %783 = vmatprep.subr.mxu0 0.0
    %784 = vmatpush1.msra.mxu0 %v123
    %785 = vmatprep.subr.mxu0 0.0
    %786 = vmatpush1.msra.mxu0 %v122
    %787 = vmatprep.subr.mxu0 0.0
    %788 = vmatpush1.msra.mxu0 %v121
    %789 = vmatprep.subr.mxu0 0.0
    %790 = vmatpush1.msra.mxu0 %v120
    %791 = vmatprep.subr.mxu0 0.0
    %792 = vmatpush2.msra.mxu0 0.0
    %793 = vmatprep.subr.mxu0 0.0
    %794 = vmatpush2.msra.mxu0 0.0
    %795 = vmatprep.subr.mxu0 0.0
    %796 = vmatpush2.msra.mxu0 0.0
    %797 = vmatprep.subr.mxu0 0.0
    %798 = vmatpush2.msra.mxu0 0.0
    %799 = vmatprep.subr.mxu0 0.0
    %800 = vmatpush2.msra.mxu0 0.0
    %801 = vmatprep.subr.mxu0 0.0
    %802 = vmatpush2.msra.mxu0 0.0
    %803 = vmatprep.subr.mxu0 0.0
    %804 = vmatpush2.msra.mxu0 0.0
    %805 = vmatprep.subr.mxu0 0.0
    %806 = vmatpush2.msra.mxu0 0.0
    %807 = vmatprep.subr.mxu0 0.0
    %808 = vmatpush2.msra.mxu0 0.0
    %809 = vmatprep.subr.mxu0 0.0
    %810 = vmatpush2.msra.mxu0 0.0
    %811 = vmatprep.subr.mxu0 0.0
    %812 = vmatpush2.msra.mxu0 0.0
    %813 = vmatprep.subr.mxu0 0.0
    %814 = vmatpush2.msra.mxu0 0.0
    %815 = vmatprep.subr.mxu0 0.0
    %816 = vmatpush2.msra.mxu0 0.0
    %817 = vmatprep.subr.mxu0 0.0
    %818 = vmatpush2.msra.mxu0 0.0
    %819 = vmatprep.subr.mxu0 0.0
    %820 = vmatpush2.msra.mxu0 0.0
    %821 = vmatprep.subr.mxu0 0.0
    %822 = vmatpush2.msra.mxu0 0.0
    %823 = vmatprep.mubr.f32.mxu0 0.0
    %824 = vmatmul.mubr.f32.gmra.mxu0 %v757
    %v825 = vpop.f32.mrf.mxu0
    %v826 = vadd.f32 0.0, %v825
    %v827 = vpop.f32.mrf.mxu0
    %828 = vdwg.mxu0
    %v830 = vrot.slane %v826, 4
    %v832 = vadd.f32 %v117, %v830
    %v833 = vxor.u32 %v832, 2147483648
    %v834 = vmul.f32 %v833, 1.442695
    %v835 = vpow.pop %v834
    %v836 = vadd.f32 %v835, 1.0
    %v837 = vrcp.pop %v836
    %v838 = vmul.f32 1.0, %v837
    %v839 = vtanh.pop %v832
    %v841 = vrot.slane %v746, 6
    %v843 = vmul.f32 %v838, %v841
    %845 = vrot.lane.b32.xlu0 %v839, 64
    %v846 = vpop.permute.xlu0 %845
    %v848 = vmul.f32 %v838, %v846
    %850 = vrot.lane.b32.xlu0 %v848, 32
    %v851 = vpop.permute.xlu0 %850
    %v853 = vadd.f32 %v843, %v851
    %v854 = vtanh.pop %v853
    %856 = vrot.lane.b32.xlu0 %v854, 64
    %v857 = vpop.permute.xlu0 %856
    %v859 = vmul.f32 %v838, %v857
    %v861 = vrot.slane %v859, 4
    %862 = vrot.lane.b32.xlu0 %v861, 32
    %v863 = vpop.permute.xlu0 %862
    %v864 = vsel %vm124, %v863, 0
    %866 = vmatprep.subr.mxu0 0.0
    %867 = vmatpush1.msra.mxu0 0.0
    %868 = vmatprep.subr.mxu0 0.0
    %869 = vmatpush1.msra.mxu0 0.0
    %870 = vmatprep.subr.mxu0 0.0
    %871 = vmatpush1.msra.mxu0 0.0
    %872 = vmatprep.subr.mxu0 0.0
    %873 = vmatpush1.msra.mxu0 0.0
    %874 = vmatprep.subr.mxu0 0.0
    %875 = vmatpush1.msra.mxu0 0.0
    %876 = vmatprep.subr.mxu0 0.0
    %877 = vmatpush1.msra.mxu0 0.0
    %878 = vmatprep.subr.mxu0 0.0
    %879 = vmatpush1.msra.mxu0 0.0
    %880 = vmatprep.subr.mxu0 0.0
    %881 = vmatpush1.msra.mxu0 0.0
    %882 = vmatprep.subr.mxu0 0.0
    %883 = vmatpush1.msra.mxu0 0.0
    %884 = vmatprep.subr.mxu0 0.0
    %885 = vmatpush1.msra.mxu0 0.0
    %886 = vmatprep.subr.mxu0 0.0
    %887 = vmatpush1.msra.mxu0 0.0
    %888 = vmatprep.subr.mxu0 0.0
    %889 = vmatpush1.msra.mxu0 0.0
    %890 = vmatprep.subr.mxu0 0.0
    %891 = vmatpush1.msra.mxu0 %v123
    %892 = vmatprep.subr.mxu0 0.0
    %893 = vmatpush1.msra.mxu0 %v122
    %894 = vmatprep.subr.mxu0 0.0
    %895 = vmatpush1.msra.mxu0 %v121
    %896 = vmatprep.subr.mxu0 0.0
    %897 = vmatpush1.msra.mxu0 %v120
    %898 = vmatprep.subr.mxu0 0.0
    %899 = vmatpush2.msra.mxu0 0.0
    %900 = vmatprep.subr.mxu0 0.0
    %901 = vmatpush2.msra.mxu0 0.0
    %902 = vmatprep.subr.mxu0 0.0
    %903 = vmatpush2.msra.mxu0 0.0
    %904 = vmatprep.subr.mxu0 0.0
    %905 = vmatpush2.msra.mxu0 0.0
    %906 = vmatprep.subr.mxu0 0.0
    %907 = vmatpush2.msra.mxu0 0.0
    %908 = vmatprep.subr.mxu0 0.0
    %909 = vmatpush2.msra.mxu0 0.0
    %910 = vmatprep.subr.mxu0 0.0
    %911 = vmatpush2.msra.mxu0 0.0
    %912 = vmatprep.subr.mxu0 0.0
    %913 = vmatpush2.msra.mxu0 0.0
    %914 = vmatprep.subr.mxu0 0.0
    %915 = vmatpush2.msra.mxu0 0.0
    %916 = vmatprep.subr.mxu0 0.0
    %917 = vmatpush2.msra.mxu0 0.0
    %918 = vmatprep.subr.mxu0 0.0
    %919 = vmatpush2.msra.mxu0 0.0
    %920 = vmatprep.subr.mxu0 0.0
    %921 = vmatpush2.msra.mxu0 0.0
    %922 = vmatprep.subr.mxu0 0.0
    %923 = vmatpush2.msra.mxu0 0.0
    %924 = vmatprep.subr.mxu0 0.0
    %925 = vmatpush2.msra.mxu0 0.0
    %926 = vmatprep.subr.mxu0 0.0
    %927 = vmatpush2.msra.mxu0 0.0
    %928 = vmatprep.subr.mxu0 0.0
    %929 = vmatpush2.msra.mxu0 0.0
    %930 = vmatprep.mubr.f32.mxu0 0.0
    %931 = vmatmul.mubr.f32.gmra.mxu0 %v864
    %v932 = vpop.f32.mrf.mxu0
    %v933 = vadd.f32 0.0, %v932
    %v934 = vpop.f32.mrf.mxu0
    %935 = vdwg.mxu0
    %v937 = vrot.slane %v933, 2
    %v939 = vadd.f32 %v117, %v937
    %v940 = vxor.u32 %v939, 2147483648
    %v941 = vmul.f32 %v940, 1.442695
    %v942 = vpow.pop %v941
    %v943 = vadd.f32 %v942, 1.0
    %v944 = vrcp.pop %v943
    %v945 = vmul.f32 1.0, %v944
    %v946 = vtanh.pop %v939
    %v948 = vrot.slane %v853, 6
    %v950 = vmul.f32 %v945, %v948
    %952 = vrot.lane.b32.xlu0 %v946, 64
    %v953 = vpop.permute.xlu0 %952
    %v955 = vmul.f32 %v945, %v953
    %957 = vrot.lane.b32.xlu0 %v955, 32
    %v958 = vpop.permute.xlu0 %957
    %v960 = vadd.f32 %v950, %v958
    %v961 = vtanh.pop %v960
    %963 = vrot.lane.b32.xlu0 %v961, 64
    %v964 = vpop.permute.xlu0 %963
    %v966 = vmul.f32 %v945, %v964
    %v967 = vld [vmem:[%s4] sm:$0xff]
    %v968 = vld [vmem:[%s4 + $0x8] sm:$0xff]
    %v969 = vld [vmem:[%s4 + $0x10] sm:$0xff]
    %v970 = vld [vmem:[%s4 + $0x18] sm:$0xff]
    %v971 = vld [vmem:[%s5] sm:$0x1]
    %v973 = vlaneseq
    %v974 = vshrl.u32 %v973, 7
    %v975 = vsub.s32 0, %v974
    %v976 = vrot.slane %v971, %v975
    %v979 = vrot.slane %v966, 6
    %980 = vrot.lane.b32.xlu0 %v979, 32
    %v981 = vpop.permute.xlu0 %980
    %v982 = vsel %vm124, %v981, 0
    %984 = vmatprep.subr.mxu0 0.0
    %985 = vmatpush1.msra.mxu0 0.0
    %986 = vmatprep.subr.mxu0 0.0
    %987 = vmatpush1.msra.mxu0 0.0
    %988 = vmatprep.subr.mxu0 0.0
    %989 = vmatpush1.msra.mxu0 0.0
    %990 = vmatprep.subr.mxu0 0.0
    %991 = vmatpush1.msra.mxu0 0.0
    %992 = vmatprep.subr.mxu0 0.0
    %993 = vmatpush1.msra.mxu0 0.0
    %994 = vmatprep.subr.mxu0 0.0
    %995 = vmatpush1.msra.mxu0 0.0
    %996 = vmatprep.subr.mxu0 0.0
    %997 = vmatpush1.msra.mxu0 0.0
    %998 = vmatprep.subr.mxu0 0.0
    %999 = vmatpush1.msra.mxu0 0.0
    %1000 = vmatprep.subr.mxu0 0.0
    %1001 = vmatpush1.msra.mxu0 0.0
    %1002 = vmatprep.subr.mxu0 0.0
    %1003 = vmatpush1.msra.mxu0 0.0
    %1004 = vmatprep.subr.mxu0 0.0
    %1005 = vmatpush1.msra.mxu0 0.0
    %1006 = vmatprep.subr.mxu0 0.0
    %1007 = vmatpush1.msra.mxu0 0.0
    %1008 = vmatprep.subr.mxu0 0.0
    %1009 = vmatpush1.msra.mxu0 %v970
    %1010 = vmatprep.subr.mxu0 0.0
    %1011 = vmatpush1.msra.mxu0 %v969
    %1012 = vmatprep.subr.mxu0 0.0
    %1013 = vmatpush1.msra.mxu0 %v968
    %1014 = vmatprep.subr.mxu0 0.0
    %1015 = vmatpush1.msra.mxu0 %v967
    %1016 = vmatprep.subr.mxu0 0.0
    %1017 = vmatpush2.msra.mxu0 0.0
    %1018 = vmatprep.subr.mxu0 0.0
    %1019 = vmatpush2.msra.mxu0 0.0
    %1020 = vmatprep.subr.mxu0 0.0
    %1021 = vmatpush2.msra.mxu0 0.0
    %1022 = vmatprep.subr.mxu0 0.0
    %1023 = vmatpush2.msra.mxu0 0.0
    %1024 = vmatprep.subr.mxu0 0.0
    %1025 = vmatpush2.msra.mxu0 0.0
    %1026 = vmatprep.subr.mxu0 0.0
    %1027 = vmatpush2.msra.mxu0 0.0
    %1028 = vmatprep.subr.mxu0 0.0
    %1029 = vmatpush2.msra.mxu0 0.0
    %1030 = vmatprep.subr.mxu0 0.0
    %1031 = vmatpush2.msra.mxu0 0.0
    %1032 = vmatprep.subr.mxu0 0.0
    %1033 = vmatpush2.msra.mxu0 0.0
    %1034 = vmatprep.subr.mxu0 0.0
    %1035 = vmatpush2.msra.mxu0 0.0
    %1036 = vmatprep.subr.mxu0 0.0
    %1037 = vmatpush2.msra.mxu0 0.0
    %1038 = vmatprep.subr.mxu0 0.0
    %1039 = vmatpush2.msra.mxu0 0.0
    %1040 = vmatprep.subr.mxu0 0.0
    %1041 = vmatpush2.msra.mxu0 0.0
    %1042 = vmatprep.subr.mxu0 0.0
    %1043 = vmatpush2.msra.mxu0 0.0
    %1044 = vmatprep.subr.mxu0 0.0
    %1045 = vmatpush2.msra.mxu0 0.0
    %1046 = vmatprep.subr.mxu0 0.0
    %1047 = vmatpush2.msra.mxu0 0.0
    %1048 = vmatprep.mubr.f32.mxu0 0.0
    %1049 = vmatmul.mubr.f32.gmra.mxu0 %v982
    %v1050 = vpop.f32.mrf.mxu0
    %v1051 = vadd.f32 %v976, %v1050
    %v1052 = vpop.f32.mrf.mxu0
    %1053 = vdwg.mxu0
    %vm1054 = vcmask 25600
    %1055 = vst.msk [vmem:[#allocation2] sm:$0x3] %vm1054, %v1051
    // Predicated region
    $region26: #{tpu_custom_call.1} parent=1 // pred_check
      _
    $region27: #{tpu_custom_call.1} parent=1 // pred_check_branch
      %1057 = sbr.rel (0) target = $region29
    $region28: #{tpu_custom_call.1} parent=1 // pred_region
      %s1059 = ssub.s32 32, 32
      %1060 = vsyncadd [#allocation3], %s1059
      %s1062 = sshll.u32 [#allocation2], 4
      %s1063 = int_to_ptr.vmem [resolvable:$true] %s1062
      %1065 = dma.vmem_to_hbm [thread:$0]  %s1063, 32, %s6, [#allocation3]
    $region29: #{tpu_custom_call.1} parent=1 // pred_fallthru
      _
    // Predicated region
    $region30: #{tpu_custom_call.1} parent=1 // pred_check
      _
    $region31: #{tpu_custom_call.1} parent=1 // pred_check_branch
      %1067 = sbr.rel (0) target = $region33
    $region32: #{tpu_custom_call.1} parent=1 // pred_region
      %1068 = dma.done [#allocation3], 32
    $region33: #{tpu_custom_call.1} parent=1 // pred_fallthru
      _
    %1069 = vsyncpa [#allocation3], 1

</llo_original>
